<compile_context>
chip_gen: v7x
topology: tpu7x:2x2x1
jax: 0.10.0
libtpu: 0.0.40
codegen_flags: <defaults>
</compile_context>

<pallas_src>
import functools

import jax
import jax.numpy as jnp
from jax.experimental import pallas as pl
from jax.experimental.pallas import tpu as pltpu


# ----------------------------- Pallas kernel ------------------------------ #

def chebnet_kernel(a_ref, x_ref, w1_ref, b1_ref, w2_ref, b2_ref, o_ref,
                   *, K: int, compute_dtype):
    """One grid step == one batch element. Both ChebConv layers fused.

    a_ref  : (N, N)        adjacency (no self loops) for this batch element
    x_ref  : (N, C_in)     node features
    w1_ref : (K*C_in, H)   layer-1 weights, order-major flattened
    b1_ref : (1, H)        layer-1 bias
    w2_ref : (K*H, D)      layer-2 weights, order-major flattened
    b2_ref : (1, D)        layer-2 bias
    o_ref  : (N, D)        output
    """
    A = a_ref[...]                                      # (N, N) f32
    # Normalization: deg in f32 (exact), rsqrt on the EUP, zero-degree guard.
    deg = jnp.sum(A, axis=-1, keepdims=True)            # (N, 1) row degree
    dinv = jnp.where(deg > 0.0, jax.lax.rsqrt(deg), 0.0)
    Ac = A.astype(compute_dtype)                        # cast once for the MXU

    def dad_apply(z):
        # (D^{-1/2} A D^{-1/2}) @ z  ==  dinv * (A @ (dinv * z))
        # Only (N,1)x(N,C) broadcasts on the VPU + one O(N^2 C) MXU matmul;
        # no dense diagonal matrices, no N^3 work, no (N,N) temporaries.
        return dinv * jnp.dot(Ac, (dinv * z).astype(compute_dtype),
                              preferred_element_type=jnp.float32)

    def cheb_layer(x, w_ref, b_ref):
        # Chebyshev recursion in feature space: z_k = T_k @ x.
        #   z_0 = x
        #   z_1 = L x       = x - DAD x
        #   z_k = 2 L z_{k-1} - z_{k-2} = 2 (z_{k-1} - DAD z_{k-1}) - z_{k-2}
        zs = [x]
        if K >= 2:
            z_prev = x
            z_cur = x - dad_apply(x)
            zs.append(z_cur)
            for _ in range(2, K):
                z_new = 2.0 * (z_cur - dad_apply(z_cur)) - z_prev
                zs.append(z_new)
                z_prev, z_cur = z_cur, z_new
        # Single wide MXU contraction:
        #   [z_0 | ... | z_{K-1}] (N, K*C)  @  [W_0; ...; W_{K-1}] (K*C, D)
        Z = jnp.concatenate(zs, axis=-1)
        res = jnp.dot(Z.astype(compute_dtype),
                      w_ref[...].astype(compute_dtype),
                      preferred_element_type=jnp.float32) + b_ref[...]
        return jnp.maximum(res, 0.0)                     # ReLU fused (both layers)

    h = cheb_layer(x_ref[...], w1_ref, b1_ref)           # (N, H) stays in VMEM
    o_ref[...] = cheb_layer(h, w2_ref, b2_ref).astype(o_ref.dtype)


# ------------------------------ Wrapper ------------------------------------ #

def chebnet_pallas(graph, x, w1, b1, w2, b2, *, K: int,
                   compute_dtype=jnp.float32):
    """graph: [B,N,N], x: [B,N,Cin], w1: [K,Cin,H], b1: [1,H],
    w2: [K,H,D], b2: [1,D]  ->  [B,N,1,D]  (== output_2.unsqueeze(2))."""
    B, N, _ = graph.shape
    Cin = x.shape[-1]
    H = w1.shape[-1]
    D = w2.shape[-1]
    # Order-major flatten so each layer's K-order contraction is ONE matmul.
    w1f = w1.reshape(K * Cin, H)
    w2f = w2.reshape(K * H, D)

    kernel = functools.partial(chebnet_kernel, K=K, compute_dtype=compute_dtype)
    out = pl.pallas_call(
        kernel,
        out_shape=jax.ShapeDtypeStruct((B, N, D), jnp.float32),
        grid_spec=pltpu.PrefetchScalarGridSpec(
            num_scalar_prefetch=0,
            grid=(B,),
            in_specs=[
                # None => squeeze the per-batch leading dim (kernel refs are 2-D).
                pl.BlockSpec((None, N, N), lambda b: (b, 0, 0)),      # graph[b]
                pl.BlockSpec((None, N, Cin), lambda b: (b, 0, 0)),    # x[b]
                pl.BlockSpec((K * Cin, H), lambda b: (0, 0)),         # w1 (shared)
                pl.BlockSpec((1, H), lambda b: (0, 0)),               # b1 (shared)
                pl.BlockSpec((K * H, D), lambda b: (0, 0)),           # w2 (shared)
                pl.BlockSpec((1, D), lambda b: (0, 0)),               # b2 (shared)
            ],
            out_specs=pl.BlockSpec((None, N, D), lambda b: (b, 0, 0)),
        ),
        compiler_params=pltpu.CompilerParams(
            # Batch elements are fully independent -> shard across v7x's 2 TCs.
            dimension_semantics=("parallel",),
        ),
        # NOTE: for graphs with N in the low thousands, raise vmem_limit_bytes
        # and/or tile the node dimension of the adjacency (v7x: 64 MiB VMEM).
    )(graph, x, w1f, b1, w2f, b2)
    return out[:, :, None, :]


def chebnet_forward(params, graph, data, K, *, compute_dtype=jnp.float32):
    Kp1 = K + 1
    return chebnet_pallas(graph, data, params["w1"], params["b1"],
                          params["w2"], params["b2"],
                          K=Kp1, compute_dtype=compute_dtype)


# ------------------------------ Params init -------------------------------- #

def init_chebnet_params(key, in_c, hid_c, out_c, K):
    """Deterministic synthetic params (xavier-normal-like std, zero bias)."""
    k1, k2 = jax.random.split(key)
    Kp1 = K + 1

    def xavier_std(kk, cin, cout):
        # torch xavier_normal_ on [K+1, 1, cin, cout]: fan_in = 1*cin*cout,
        # fan_out = (K+1)*cin*cout, std = sqrt(2 / (fan_in + fan_out))
        fan_in = 1 * cin * cout
        fan_out = kk * cin * cout
        return (2.0 / (fan_in + fan_out)) ** 0.5

    w1 = jax.random.normal(k1, (Kp1, in_c, hid_c), jnp.float32) * xavier_std(Kp1, in_c, hid_c)
    b1 = jnp.zeros((1, hid_c), jnp.float32)
    w2 = jax.random.normal(k2, (Kp1, hid_c, out_c), jnp.float32) * xavier_std(Kp1, hid_c, out_c)
    b2 = jnp.zeros((1, out_c), jnp.float32)
    return {"w1": w1, "b1": b1, "w2": w2, "b2": b2}


# --------------------------- Pure-JAX reference ----------------------------- #

def chebconv_ref(graph, x, weight, bias, K):
    B, N, _ = graph.shape
    eye = jnp.eye(N, dtype=jnp.float32)
    dinv = jnp.sum(graph, axis=-1) ** -0.5
    Dm = jax.vmap(jnp.diag)(dinv)                       # [B,N,N]
    L = eye[None] - Dm @ graph @ Dm
    Ts = [jnp.broadcast_to(eye, (B, N, N))]
    if K >= 2:
        Ts.append(L)
        for _ in range(2, K):
            Ts.append(2.0 * jnp.matmul(L, Ts[-1]) - Ts[-2])
    mul_L = jnp.stack(Ts[:K], axis=0)                   # [K,B,N,N]
    r = jnp.einsum("kbnm,bmc->kbnc", mul_L, x)
    r = jnp.einsum("kbnc,kcd->kbnd", r, weight)
    return r.sum(0) + bias[None]                        # [B,N,D]


def chebnet_ref(params, graph, data, K):
    Kp1 = K + 1
    h = jax.nn.relu(chebconv_ref(graph, data, params["w1"], params["b1"], Kp1))
    o = jax.nn.relu(chebconv_ref(graph, h, params["w2"], params["b2"], Kp1))
    return o[:, :, None, :]


# ---------------------------------- main ------------------------------------ #

if __name__ == "__main__":
    B, N = 2, 16
    in_c, hid_c, out_c, K = 4, 32, 8, 3

    key = jax.random.PRNGKey(0)
    kg, kx, kp = jax.random.split(key, 3)

    # Positive adjacency (no self loops) so degrees are positive.
    adj = jax.random.uniform(kg, (B, N, N), jnp.float32, minval=0.1, maxval=1.0)
    adj = adj * (1.0 - jnp.eye(N, dtype=jnp.float32))[None]
    data = jax.random.normal(kx, (B, N, in_c), jnp.float32)

    params = init_chebnet_params(kp, in_c, hid_c, out_c, K)

    ref = jax.block_until_ready(chebnet_ref(params, adj, data, K))

    # f32 MXU path: tight check vs. the pure-JAX reference.
    out_f32 = jax.block_until_ready(
        chebnet_forward(params, adj, data, K, compute_dtype=jnp.float32))
    assert out_f32.shape == (B, N, 1, out_c), out_f32.shape
    assert jnp.allclose(out_f32, ref, rtol=1e-4, atol=5e-4), \
        float(jnp.max(jnp.abs(out_f32 - ref)))

    # bf16 MXU path (2x MXU throughput, f32 accumulation): looser check.
    out_bf16 = jax.block_until_ready(
        chebnet_forward(params, adj, data, K, compute_dtype=jnp.bfloat16))
    assert out_bf16.shape == (B, N, 1, out_c), out_bf16.shape
    assert jnp.allclose(out_bf16, ref, rtol=5e-2, atol=5e-2), \
        float(jnp.max(jnp.abs(out_bf16 - ref)))

    print("KERNEL_OK")
</pallas_src>

<mosaic_0001>
module attributes {stable_mosaic.version = 11 : i64} {
  func.func @chebnet_kernel(%arg0: i32, %arg1: memref<1x16x16xf32, #tpu.memory_space<vmem>>, %arg2: memref<1x16x4xf32, #tpu.memory_space<vmem>>, %arg3: memref<16x32xf32, #tpu.memory_space<vmem>>, %arg4: memref<1x32xf32, #tpu.memory_space<vmem>>, %arg5: memref<128x8xf32, #tpu.memory_space<vmem>>, %arg6: memref<1x8xf32, #tpu.memory_space<vmem>>, %arg7: memref<1x16x8xf32, #tpu.memory_space<vmem>>) attributes {dimension_semantics = [#tpu.dimension_semantics<parallel>], iteration_bounds = array<i64: 2>, scalar_prefetch = 0 : i64, scratch_operands = 0 : i64, tpu.core_type = #tpu.core_type<tc>, window_params = [{transform_indices = @transform_0, window_bounds = array<i64: 1, 16, 16>}, {transform_indices = @transform_1, window_bounds = array<i64: 1, 16, 4>}, {pipeline_mode = #tpu.pipeline_mode<synchronous>, transform_indices = @transform_2, window_bounds = array<i64: 16, 32>}, {pipeline_mode = #tpu.pipeline_mode<synchronous>, transform_indices = @transform_3, window_bounds = array<i64: 1, 32>}, {pipeline_mode = #tpu.pipeline_mode<synchronous>, transform_indices = @transform_4, window_bounds = array<i64: 128, 8>}, {pipeline_mode = #tpu.pipeline_mode<synchronous>, transform_indices = @transform_5, window_bounds = array<i64: 1, 8>}, {transform_indices = @transform_6, window_bounds = array<i64: 1, 16, 8>}]} {
    %c0 = arith.constant 0 : index
    %c0_0 = arith.constant 0 : index
    %c0_1 = arith.constant 0 : index
    %0 = vector.load %arg1[%c0, %c0_0, %c0_1] : memref<1x16x16xf32, #tpu.memory_space<vmem>>, vector<1x16x16xf32>
    %1 = vector.shape_cast %0 : vector<1x16x16xf32> to vector<16x16xf32>
    %cst = arith.constant dense<0.000000e+00> : vector<16xf32>
    %2 = vector.multi_reduction <add>, %1, %cst [1] : vector<16x16xf32> to vector<16xf32>
    %3 = vector.shape_cast %2 : vector<16xf32> to vector<16x1xf32>
    %cst_2 = arith.constant 0.000000e+00 : f32
    %4 = vector.broadcast %cst_2 : f32 to vector<16x1xf32>
    %5 = arith.cmpf ogt, %3, %4 : vector<16x1xf32>
    %6 = math.rsqrt %3 : vector<16x1xf32>
    %cst_3 = arith.constant 0.000000e+00 : f32
    %7 = vector.broadcast %cst_3 : f32 to vector<16x1xf32>
    %8 = arith.select %5, %6, %7 : vector<16x1xi1>, vector<16x1xf32>
    %c0_4 = arith.constant 0 : index
    %c0_5 = arith.constant 0 : index
    %c0_6 = arith.constant 0 : index
    %9 = vector.load %arg2[%c0_4, %c0_5, %c0_6] : memref<1x16x4xf32, #tpu.memory_space<vmem>>, vector<1x16x4xf32>
    %10 = vector.shape_cast %9 : vector<1x16x4xf32> to vector<16x4xf32>
    %11 = vector.broadcast %8 : vector<16x1xf32> to vector<16x4xf32>
    %12 = arith.mulf %11, %10 : vector<16x4xf32>
    %cst_7 = arith.constant dense<0.000000e+00> : vector<16x4xf32>
    %13 = tpu.matmul %1, %12, %cst_7 {dimension_numbers = #tpu.dot_dimension_numbers<[1], [0], [0], [1], [0, 0, 1, 1], [], []>} : vector<16x16xf32>, vector<16x4xf32>, vector<16x4xf32> -> vector<16x4xf32>
    %14 = vector.broadcast %8 : vector<16x1xf32> to vector<16x4xf32>
    %15 = arith.mulf %14, %13 : vector<16x4xf32>
    %16 = arith.subf %10, %15 : vector<16x4xf32>
    %17 = vector.broadcast %8 : vector<16x1xf32> to vector<16x4xf32>
    %18 = arith.mulf %17, %16 : vector<16x4xf32>
    %cst_8 = arith.constant dense<0.000000e+00> : vector<16x4xf32>
    %19 = tpu.matmul %1, %18, %cst_8 {dimension_numbers = #tpu.dot_dimension_numbers<[1], [0], [0], [1], [0, 0, 1, 1], [], []>} : vector<16x16xf32>, vector<16x4xf32>, vector<16x4xf32> -> vector<16x4xf32>
    %20 = vector.broadcast %8 : vector<16x1xf32> to vector<16x4xf32>
    %21 = arith.mulf %20, %19 : vector<16x4xf32>
    %22 = arith.subf %16, %21 : vector<16x4xf32>
    %cst_9 = arith.constant 2.000000e+00 : f32
    %23 = vector.broadcast %cst_9 : f32 to vector<16x4xf32>
    %24 = arith.mulf %23, %22 : vector<16x4xf32>
    %25 = arith.subf %24, %10 : vector<16x4xf32>
    %26 = vector.broadcast %8 : vector<16x1xf32> to vector<16x4xf32>
    %27 = arith.mulf %26, %25 : vector<16x4xf32>
    %cst_10 = arith.constant dense<0.000000e+00> : vector<16x4xf32>
    %28 = tpu.matmul %1, %27, %cst_10 {dimension_numbers = #tpu.dot_dimension_numbers<[1], [0], [0], [1], [0, 0, 1, 1], [], []>} : vector<16x16xf32>, vector<16x4xf32>, vector<16x4xf32> -> vector<16x4xf32>
    %29 = vector.broadcast %8 : vector<16x1xf32> to vector<16x4xf32>
    %30 = arith.mulf %29, %28 : vector<16x4xf32>
    %31 = arith.subf %25, %30 : vector<16x4xf32>
    %cst_11 = arith.constant 2.000000e+00 : f32
    %32 = vector.broadcast %cst_11 : f32 to vector<16x4xf32>
    %33 = arith.mulf %32, %31 : vector<16x4xf32>
    %34 = arith.subf %33, %16 : vector<16x4xf32>
    %35 = tpu.concatenate %10, %16, %25, %34 in 1 : vector<16x4xf32>, vector<16x4xf32>, vector<16x4xf32>, vector<16x4xf32> -> vector<16x16xf32>
    %c0_12 = arith.constant 0 : index
    %c0_13 = arith.constant 0 : index
    %36 = vector.load %arg3[%c0_12, %c0_13] : memref<16x32xf32, #tpu.memory_space<vmem>>, vector<16x32xf32>
    %cst_14 = arith.constant dense<0.000000e+00> : vector<16x32xf32>
    %37 = tpu.matmul %35, %36, %cst_14 {dimension_numbers = #tpu.dot_dimension_numbers<[1], [0], [0], [1], [0, 0, 1, 1], [], []>} : vector<16x16xf32>, vector<16x32xf32>, vector<16x32xf32> -> vector<16x32xf32>
    %c0_15 = arith.constant 0 : index
    %c0_16 = arith.constant 0 : index
    %38 = vector.load %arg4[%c0_15, %c0_16] : memref<1x32xf32, #tpu.memory_space<vmem>>, vector<1x32xf32>
    %39 = vector.broadcast %38 : vector<1x32xf32> to vector<16x32xf32>
    %40 = arith.addf %37, %39 : vector<16x32xf32>
    %cst_17 = arith.constant 0.000000e+00 : f32
    %41 = vector.broadcast %cst_17 : f32 to vector<16x32xf32>
    %42 = arith.maximumf %40, %41 : vector<16x32xf32>
    %43 = vector.broadcast %8 : vector<16x1xf32> to vector<16x32xf32>
    %44 = arith.mulf %43, %42 : vector<16x32xf32>
    %cst_18 = arith.constant dense<0.000000e+00> : vector<16x32xf32>
    %45 = tpu.matmul %1, %44, %cst_18 {dimension_numbers = #tpu.dot_dimension_numbers<[1], [0], [0], [1], [0, 0, 1, 1], [], []>} : vector<16x16xf32>, vector<16x32xf32>, vector<16x32xf32> -> vector<16x32xf32>
    %46 = vector.broadcast %8 : vector<16x1xf32> to vector<16x32xf32>
    %47 = arith.mulf %46, %45 : vector<16x32xf32>
    %48 = arith.subf %42, %47 : vector<16x32xf32>
    %49 = vector.broadcast %8 : vector<16x1xf32> to vector<16x32xf32>
    %50 = arith.mulf %49, %48 : vector<16x32xf32>
    %cst_19 = arith.constant dense<0.000000e+00> : vector<16x32xf32>
    %51 = tpu.matmul %1, %50, %cst_19 {dimension_numbers = #tpu.dot_dimension_numbers<[1], [0], [0], [1], [0, 0, 1, 1], [], []>} : vector<16x16xf32>, vector<16x32xf32>, vector<16x32xf32> -> vector<16x32xf32>
    %52 = vector.broadcast %8 : vector<16x1xf32> to vector<16x32xf32>
    %53 = arith.mulf %52, %51 : vector<16x32xf32>
    %54 = arith.subf %48, %53 : vector<16x32xf32>
    %cst_20 = arith.constant 2.000000e+00 : f32
    %55 = vector.broadcast %cst_20 : f32 to vector<16x32xf32>
    %56 = arith.mulf %55, %54 : vector<16x32xf32>
    %57 = arith.subf %56, %42 : vector<16x32xf32>
    %58 = vector.broadcast %8 : vector<16x1xf32> to vector<16x32xf32>
    %59 = arith.mulf %58, %57 : vector<16x32xf32>
    %cst_21 = arith.constant dense<0.000000e+00> : vector<16x32xf32>
    %60 = tpu.matmul %1, %59, %cst_21 {dimension_numbers = #tpu.dot_dimension_numbers<[1], [0], [0], [1], [0, 0, 1, 1], [], []>} : vector<16x16xf32>, vector<16x32xf32>, vector<16x32xf32> -> vector<16x32xf32>
    %61 = vector.broadcast %8 : vector<16x1xf32> to vector<16x32xf32>
    %62 = arith.mulf %61, %60 : vector<16x32xf32>
    %63 = arith.subf %57, %62 : vector<16x32xf32>
    %cst_22 = arith.constant 2.000000e+00 : f32
    %64 = vector.broadcast %cst_22 : f32 to vector<16x32xf32>
    %65 = arith.mulf %64, %63 : vector<16x32xf32>
    %66 = arith.subf %65, %48 : vector<16x32xf32>
    %67 = tpu.concatenate %42, %48, %57, %66 in 1 : vector<16x32xf32>, vector<16x32xf32>, vector<16x32xf32>, vector<16x32xf32> -> vector<16x128xf32>
    %c0_23 = arith.constant 0 : index
    %c0_24 = arith.constant 0 : index
    %68 = vector.load %arg5[%c0_23, %c0_24] : memref<128x8xf32, #tpu.memory_space<vmem>>, vector<128x8xf32>
    %cst_25 = arith.constant dense<0.000000e+00> : vector<16x8xf32>
    %69 = tpu.matmul %67, %68, %cst_25 {dimension_numbers = #tpu.dot_dimension_numbers<[1], [0], [0], [1], [0, 0, 1, 1], [], []>} : vector<16x128xf32>, vector<128x8xf32>, vector<16x8xf32> -> vector<16x8xf32>
    %c0_26 = arith.constant 0 : index
    %c0_27 = arith.constant 0 : index
    %70 = vector.load %arg6[%c0_26, %c0_27] : memref<1x8xf32, #tpu.memory_space<vmem>>, vector<1x8xf32>
    %71 = vector.broadcast %70 : vector<1x8xf32> to vector<16x8xf32>
    %72 = arith.addf %69, %71 : vector<16x8xf32>
    %cst_28 = arith.constant 0.000000e+00 : f32
    %73 = vector.broadcast %cst_28 : f32 to vector<16x8xf32>
    %74 = arith.maximumf %72, %73 : vector<16x8xf32>
    %c0_29 = arith.constant 0 : index
    %c0_30 = arith.constant 0 : index
    %c0_31 = arith.constant 0 : index
    %75 = vector.load %arg7[%c0_29, %c0_30, %c0_31] : memref<1x16x8xf32, #tpu.memory_space<vmem>>, vector<1x16x8xf32>
    %76 = vector.shape_cast %75 : vector<1x16x8xf32> to vector<16x8xf32>
    %77 = vector.shape_cast %74 : vector<16x8xf32> to vector<1x16x8xf32>
    tpu.vector_store %arg7[%c0_29, %c0_30, %c0_31], %77 {strides = array<i32>} : memref<1x16x8xf32, #tpu.memory_space<vmem>>, vector<1x16x8xf32>,
    return
  }
  func.func @transform_0(%arg0: i32) -> (i32, i32, i32) {
    %c0_i32 = arith.constant 0 : i32
    %c0_i32_0 = arith.constant 0 : i32
    %c0_i32_1 = arith.constant 0 : i32
    return %arg0, %c0_i32, %c0_i32_0 : i32, i32, i32
  }
  func.func @transform_1(%arg0: i32) -> (i32, i32, i32) {
    %c0_i32 = arith.constant 0 : i32
    %c0_i32_0 = arith.constant 0 : i32
    %c0_i32_1 = arith.constant 0 : i32
    return %arg0, %c0_i32, %c0_i32_0 : i32, i32, i32
  }
  func.func @transform_2(%arg0: i32) -> (i32, i32) {
    %c0_i32 = arith.constant 0 : i32
    %c0_i32_0 = arith.constant 0 : i32
    %c0_i32_1 = arith.constant 0 : i32
    return %c0_i32, %c0_i32_0 : i32, i32
  }
  func.func @transform_3(%arg0: i32) -> (i32, i32) {
    %c0_i32 = arith.constant 0 : i32
    %c0_i32_0 = arith.constant 0 : i32
    %c0_i32_1 = arith.constant 0 : i32
    return %c0_i32, %c0_i32_0 : i32, i32
  }
  func.func @transform_4(%arg0: i32) -> (i32, i32) {
    %c0_i32 = arith.constant 0 : i32
    %c0_i32_0 = arith.constant 0 : i32
    %c0_i32_1 = arith.constant 0 : i32
    return %c0_i32, %c0_i32_0 : i32, i32
  }
  func.func @transform_5(%arg0: i32) -> (i32, i32) {
    %c0_i32 = arith.constant 0 : i32
    %c0_i32_0 = arith.constant 0 : i32
    %c0_i32_1 = arith.constant 0 : i32
    return %c0_i32, %c0_i32_0 : i32, i32
  }
  func.func @transform_6(%arg0: i32) -> (i32, i32, i32) {
    %c0_i32 = arith.constant 0 : i32
    %c0_i32_0 = arith.constant 0 : i32
    %c0_i32_1 = arith.constant 0 : i32
    return %arg0, %c0_i32, %c0_i32_0 : i32, i32, i32
  }
}

</mosaic_0001>

<llo_original>
// kernel: tpu_custom_call.1
$region0: #{tpu_custom_call.1}
  #allocation0 [shape = 'u32[]', space=smem, size = 0x4, offset = 0x4, fixed_abs, tag = 'smem constant byte address 0x4 - core index']
  #allocation1 [shape = 'u32[144,128]{1,0:T(1,128)}', space=vmem, size = 0x12000, scoped, tag = 'internal scratch']
  %s0 = inlined_call_operand.vmem [shape: f32[2,16,16], index: 0, kind: input, shape index: {}]
  %s1 = inlined_call_operand.vmem [shape: f32[2,16,4], index: 1, kind: input, shape index: {}]
  %s2 = inlined_call_operand.vmem [shape: f32[16,32], index: 2, kind: input, shape index: {}]
  %s3 = inlined_call_operand.vmem [shape: f32[1,32], index: 3, kind: input, shape index: {}]
  %s4 = inlined_call_operand.vmem [shape: f32[128,8], index: 4, kind: input, shape index: {}]
  %s5 = inlined_call_operand.vmem [shape: f32[1,8], index: 5, kind: input, shape index: {}]
  %s6 = inlined_call_operand.vmem [shape: f32[2,16,8], index: 6, kind: output, shape index: {}]
  %s7 = sld [smem:[#allocation0]]
  $region57: #{tpu_custom_call.1} parent=0
    _
  %s9 = ssub.s32 1, %s7
  %s10 = scalar_select 0, %s9, %s7
  loop: start=0, step=1, limit=4
  $region2: #{tpu_custom_call.1} parent=0 // loop_pre_header
    _
  $region3: #{tpu_custom_call.1} parent=0 // loop_header
    %s12 = sphi 0, %s16
    %p13 = scmp.ge.s32.totalorder %s12, 4
    %s22 = sphi 0, %s24
    %s25 = sphi 0, %s22
    %s26 = sphi 0, %s25
    %s42 = sphi 0, %s26
    %s48 = sphi 0, %s50
    %s51 = sphi 0, %s48
    %s52 = sphi 0, %s51
    %s68 = sphi 0, %s52
    %s72 = sphi 0, %s72
    %s74 = sphi 0, %s72
    %s75 = sphi 0, %s74
    %s89 = sphi 0, %s75
    %s93 = sphi 0, %s93
    %s95 = sphi 0, %s93
    %s96 = sphi 0, %s95
    %s110 = sphi 0, %s96
    %s114 = sphi 0, %s114
    %s116 = sphi 0, %s114
    %s117 = sphi 0, %s116
    %s131 = sphi 0, %s117
    %s135 = sphi 0, %s135
    %s137 = sphi 0, %s135
    %s138 = sphi 0, %s137
    %s152 = sphi 0, %s138
    %s158 = sphi 0, %s160
    %s161 = sphi 0, %s158
    %s162 = sphi 0, %s161
    %s178 = sphi 0, %s162
  $region4: #{tpu_custom_call.1} parent=0 // loop_header_branch
    %15 = sbr.rel (%p13) target = $region8
  $region5: #{tpu_custom_call.1} parent=0 // loop_body
    %s17 = ssub.s32 %s12, 1
    %s18 = ssub.s32 %s12, 2
    %s19 = sadd.s32 %s12, 1
    %s20 = ssub.s32 %s12, %s19
    %p21 = scmp.eq.s32.totalorder %s20, 0
    %s23 = sadd.s32 %s22, 1
    %s24 = scalar_select %p21, %s22, %s23
    %p27 = pneg %p21
    %p28 = scmp.eq.s32.totalorder %s12, 1
    %p29 = por %p27, %p28
    %p30 = scmp.ne.s32.totalorder %s22, %s25
    %p31 = scmp.eq.s32.totalorder %s12, 0
    %p32 = por %p30, %p31
    %p33 = scmp.ne.s32.totalorder %s22, %s25
    %p34 = scmp.eq.s32.totalorder %s17, 1
    %p35 = por %p33, %p34
    %p36 = scmp.ne.s32.totalorder %s25, %s26
    %p37 = scmp.eq.s32.totalorder %s17, 0
    %p38 = por %p36, %p37
    %p39 = scmp.ne.s32.totalorder %s25, %s26
    %p40 = scmp.eq.s32.totalorder %s18, 1
    %p41 = por %p39, %p40
    %p43 = scmp.ne.s32.totalorder %s26, %s42
    %p44 = scmp.eq.s32.totalorder %s18, 0
    %p45 = por %p43, %p44
    %s46 = ssub.s32 %s12, %s19
    %p47 = scmp.eq.s32.totalorder %s46, 0
    %s49 = sadd.s32 %s48, 1
    %s50 = scalar_select %p47, %s48, %s49
    %p53 = pneg %p47
    %p54 = scmp.eq.s32.totalorder %s12, 1
    %p55 = por %p53, %p54
    %p56 = scmp.ne.s32.totalorder %s48, %s51
    %p57 = scmp.eq.s32.totalorder %s12, 0
    %p58 = por %p56, %p57
    %p59 = scmp.ne.s32.totalorder %s48, %s51
    %p60 = scmp.eq.s32.totalorder %s17, 1
    %p61 = por %p59, %p60
    %p62 = scmp.ne.s32.totalorder %s51, %s52
    %p63 = scmp.eq.s32.totalorder %s17, 0
    %p64 = por %p62, %p63
    %p65 = scmp.ne.s32.totalorder %s51, %s52
    %p66 = scmp.eq.s32.totalorder %s18, 1
    %p67 = por %p65, %p66
    %p69 = scmp.ne.s32.totalorder %s52, %s68
    %p70 = scmp.eq.s32.totalorder %s18, 0
    %p71 = por %p69, %p70
    %s73 = sadd.s32 %s72, 1
    %p76 = scmp.eq.s32.totalorder %s12, 1
    %p77 = scmp.ne.s32.totalorder %s72, %s74
    %p78 = scmp.eq.s32.totalorder %s12, 0
    %p79 = por %p77, %p78
    %p80 = scmp.ne.s32.totalorder %s72, %s74
    %p81 = scmp.eq.s32.totalorder %s17, 1
    %p82 = por %p80, %p81
    %p83 = scmp.ne.s32.totalorder %s74, %s75
    %p84 = scmp.eq.s32.totalorder %s17, 0
    %p85 = por %p83, %p84
    %p86 = scmp.ne.s32.totalorder %s74, %s75
    %p87 = scmp.eq.s32.totalorder %s18, 1
    %p88 = por %p86, %p87
    %p90 = scmp.ne.s32.totalorder %s75, %s89
    %p91 = scmp.eq.s32.totalorder %s18, 0
    %p92 = por %p90, %p91
    %s94 = sadd.s32 %s93, 1
    %p97 = scmp.eq.s32.totalorder %s12, 1
    %p98 = scmp.ne.s32.totalorder %s93, %s95
    %p99 = scmp.eq.s32.totalorder %s12, 0
    %p100 = por %p98, %p99
    %p101 = scmp.ne.s32.totalorder %s93, %s95
    %p102 = scmp.eq.s32.totalorder %s17, 1
    %p103 = por %p101, %p102
    %p104 = scmp.ne.s32.totalorder %s95, %s96
    %p105 = scmp.eq.s32.totalorder %s17, 0
    %p106 = por %p104, %p105
    %p107 = scmp.ne.s32.totalorder %s95, %s96
    %p108 = scmp.eq.s32.totalorder %s18, 1
    %p109 = por %p107, %p108
    %p111 = scmp.ne.s32.totalorder %s96, %s110
    %p112 = scmp.eq.s32.totalorder %s18, 0
    %p113 = por %p111, %p112
    %s115 = sadd.s32 %s114, 1
    %p118 = scmp.eq.s32.totalorder %s12, 1
    %p119 = scmp.ne.s32.totalorder %s114, %s116
    %p120 = scmp.eq.s32.totalorder %s12, 0
    %p121 = por %p119, %p120
    %p122 = scmp.ne.s32.totalorder %s114, %s116
    %p123 = scmp.eq.s32.totalorder %s17, 1
    %p124 = por %p122, %p123
    %p125 = scmp.ne.s32.totalorder %s116, %s117
    %p126 = scmp.eq.s32.totalorder %s17, 0
    %p127 = por %p125, %p126
    %p128 = scmp.ne.s32.totalorder %s116, %s117
    %p129 = scmp.eq.s32.totalorder %s18, 1
    %p130 = por %p128, %p129
    %p132 = scmp.ne.s32.totalorder %s117, %s131
    %p133 = scmp.eq.s32.totalorder %s18, 0
    %p134 = por %p132, %p133
    %s136 = sadd.s32 %s135, 1
    %p139 = scmp.eq.s32.totalorder %s12, 1
    %p140 = scmp.ne.s32.totalorder %s135, %s137
    %p141 = scmp.eq.s32.totalorder %s12, 0
    %p142 = por %p140, %p141
    %p143 = scmp.ne.s32.totalorder %s135, %s137
    %p144 = scmp.eq.s32.totalorder %s17, 1
    %p145 = por %p143, %p144
    %p146 = scmp.ne.s32.totalorder %s137, %s138
    %p147 = scmp.eq.s32.totalorder %s17, 0
    %p148 = por %p146, %p147
    %p149 = scmp.ne.s32.totalorder %s137, %s138
    %p150 = scmp.eq.s32.totalorder %s18, 1
    %p151 = por %p149, %p150
    %p153 = scmp.ne.s32.totalorder %s138, %s152
    %p154 = scmp.eq.s32.totalorder %s18, 0
    %p155 = por %p153, %p154
    %s156 = ssub.s32 %s12, %s19
    %p157 = scmp.eq.s32.totalorder %s156, 0
    %s159 = sadd.s32 %s158, 1
    %s160 = scalar_select %p157, %s158, %s159
    %p163 = pneg %p157
    %p164 = scmp.eq.s32.totalorder %s12, 1
    %p165 = por %p163, %p164
    %p166 = scmp.ne.s32.totalorder %s158, %s161
    %p167 = scmp.eq.s32.totalorder %s12, 0
    %p168 = por %p166, %p167
    %p169 = scmp.ne.s32.totalorder %s158, %s161
    %p170 = scmp.eq.s32.totalorder %s17, 1
    %p171 = por %p169, %p170
    %p172 = scmp.ne.s32.totalorder %s161, %s162
    %p173 = scmp.eq.s32.totalorder %s17, 0
    %p174 = por %p172, %p173
    %p175 = scmp.ne.s32.totalorder %s161, %s162
    %p176 = scmp.eq.s32.totalorder %s18, 1
    %p177 = por %p175, %p176
    %p179 = scmp.ne.s32.totalorder %s162, %s178
    %p180 = scmp.eq.s32.totalorder %s18, 0
    %p181 = por %p179, %p180
    %p182 = scmp.le.s32.totalorder 1, %s12
    %p183 = scmp.lt.s32.totalorder %s12, 3
    %p184 = pnand %p182, %p183
    %p185 = pneg %p184
    // Predicated region
    $region9: #{tpu_custom_call.1} parent=5 // pred_check
      _
    $region10: #{tpu_custom_call.1} parent=5 // pred_check_branch
      %187 = sbr.rel (%p184) target = $region12
    $region11: #{tpu_custom_call.1} parent=5 // pred_region
      %s188 = ssub.s32 %s12, 1
      // Predicated region
      $region13: #{tpu_custom_call.1} parent=11 // pred_check
        %p189 = pneg %p85
      $region14: #{tpu_custom_call.1} parent=11 // pred_check_branch
        %191 = sbr.rel (%p189) target = $region16
      $region15: #{tpu_custom_call.1} parent=11 // pred_region
        _
      $region16: #{tpu_custom_call.1} parent=11 // pred_fallthru
        _
      // Predicated region
      $region17: #{tpu_custom_call.1} parent=11 // pred_check
        %p192 = pneg %p106
      $region18: #{tpu_custom_call.1} parent=11 // pred_check_branch
        %194 = sbr.rel (%p192) target = $region20
      $region19: #{tpu_custom_call.1} parent=11 // pred_region
        _
      $region20: #{tpu_custom_call.1} parent=11 // pred_fallthru
        _
      // Predicated region
      $region21: #{tpu_custom_call.1} parent=11 // pred_check
        %p195 = pneg %p127
      $region22: #{tpu_custom_call.1} parent=11 // pred_check_branch
        %197 = sbr.rel (%p195) target = $region24
      $region23: #{tpu_custom_call.1} parent=11 // pred_region
        _
      $region24: #{tpu_custom_call.1} parent=11 // pred_fallthru
        _
      // Predicated region
      $region25: #{tpu_custom_call.1} parent=11 // pred_check
        %p198 = pneg %p148
      $region26: #{tpu_custom_call.1} parent=11 // pred_check_branch
        %200 = sbr.rel (%p198) target = $region28
      $region27: #{tpu_custom_call.1} parent=11 // pred_region
        _
      $region28: #{tpu_custom_call.1} parent=11 // pred_fallthru
        _
    $region12: #{tpu_custom_call.1} parent=5 // pred_fallthru
      _
    %p201 = scmp.lt.s32.totalorder %s12, 2
    // Predicated region
    $region29: #{tpu_custom_call.1} parent=5 // pred_check
      %p202 = pneg %p201
    $region30: #{tpu_custom_call.1} parent=5 // pred_check_branch
      %204 = sbr.rel (%p202) target = $region32
    $region31: #{tpu_custom_call.1} parent=5 // pred_region
      // Predicated region
      $region33: #{tpu_custom_call.1} parent=31 // pred_check
        %p205 = pneg %p32
      $region34: #{tpu_custom_call.1} parent=31 // pred_check_branch
        %207 = sbr.rel (%p205) target = $region36
      $region35: #{tpu_custom_call.1} parent=31 // pred_region
        %p208 = scmp.lt.s32.totalorder %s12, 1
        %s209 = scalar_select %p208, %s12, 1
        %s210 = smul.addr %s209, 2
        %s211 = smul.addr %s210, 8
        %s212 = scalar_lea.vmem %s0, %s211
      $region36: #{tpu_custom_call.1} parent=31 // pred_fallthru
        _
      // Predicated region
      $region37: #{tpu_custom_call.1} parent=31 // pred_check
        %p213 = pneg %p58
      $region38: #{tpu_custom_call.1} parent=31 // pred_check_branch
        %215 = sbr.rel (%p213) target = $region40
      $region39: #{tpu_custom_call.1} parent=31 // pred_region
        %p216 = scmp.lt.s32.totalorder %s12, 1
        %s217 = scalar_select %p216, %s12, 1
        %s218 = smul.addr %s217, 2
        %s219 = smul.addr %s218, 8
        %s220 = scalar_lea.vmem %s1, %s219
      $region40: #{tpu_custom_call.1} parent=31 // pred_fallthru
        _
    $region32: #{tpu_custom_call.1} parent=5 // pred_fallthru
      _
    %p221 = scmp.le.s32.totalorder 1, %s12
    %p222 = scmp.lt.s32.totalorder %s12, 3
    %p223 = pnand %p221, %p222
    %p224 = pneg %p223
    // Predicated region
    $region41: #{tpu_custom_call.1} parent=5 // pred_check
      _
    $region42: #{tpu_custom_call.1} parent=5 // pred_check_branch
      %226 = sbr.rel (%p223) target = $region44
    $region43: #{tpu_custom_call.1} parent=5 // pred_region
      %s227 = ssub.s32 %s12, 1
      %p228 = scmp.lt.s32.totalorder %s17, 1
      %s229 = scalar_select %p228, %s17, 1
      %s230 = smul.addr %s229, 2
      %s231 = smul.addr %s230, 8
      %s232 = scalar_lea.vmem %s0, %s231
      %p233 = pneg %p38
      %p234 = pneg %p35
      %p235 = scmp.lt.s32.totalorder %s17, 1
      %s236 = scalar_select %p235, %s17, 1
      %s237 = smul.addr %s236, 2
      %s238 = smul.addr %s237, 8
      %s239 = scalar_lea.vmem %s1, %s238
      %p240 = pneg %p64
      %p241 = pneg %p61
      %p242 = pneg %p85
      %p243 = pneg %p82
      %p244 = pneg %p106
      %p245 = pneg %p103
      %p246 = pneg %p127
      %p247 = pneg %p124
      %p248 = pneg %p148
      %p249 = pneg %p145
      %p250 = pneg %p174
      %p251 = pneg %p171
      %p252 = scmp.lt.s32.totalorder %s17, 1
      %s253 = scalar_select %p252, %s17, 1
      %s254 = smul.addr %s253, 2
      %s255 = smul.addr %s254, 8
      %s256 = scalar_lea.vmem %s6, %s255
      %p257 = scmp.lt.s32.totalorder %s17, 1
      %s258 = scalar_select %p257, %s17, 1
      %s259 = smul.addr %s258, 2
      %s260 = smul.addr %s259, 8
      %s261 = scalar_lea.vmem %s0, %s260
      %p262 = scmp.lt.s32.totalorder %s17, 1
      %s263 = scalar_select %p262, %s17, 1
      %s264 = smul.addr %s263, 2
      %s265 = smul.addr %s264, 8
      %s266 = scalar_lea.vmem %s1, %s265
      %p267 = scmp.lt.s32.totalorder %s17, 1
      %s268 = scalar_select %p267, %s17, 1
      %s269 = smul.addr %s268, 2
      %s270 = smul.addr %s269, 8
      %s271 = scalar_lea.vmem %s6, %s270
      %v272 = vld [vmem:[%s261] sm:$0xff]
      %v273 = vld [vmem:[%s261 + $0x8] sm:$0xff]
      %vm274 = vcmask 130048
      %v275 = vsel %vm274, %v272, 0.0
      %276 = vadd.xlane.f32.xlu0 %v275
      %v277 = vpop.xlane.xlu0 %276
      %v278 = vsel %vm274, %v273, 0.0
      %279 = vadd.xlane.f32.xlu0 %v278
      %v280 = vpop.xlane.xlu0 %279
      %vm281 = vcmp.gt.f32.partialorder %v277, 0.0
      %vm282 = vcmp.gt.f32.partialorder %v280, 0.0
      %v283 = vrsqrt.pop %v277
      %v284 = vrsqrt.pop %v280
      %v285 = vsel %vm281, %v283, 0.0
      %v286 = vsel %vm282, %v284, 0.0
      %v287 = vld [vmem:[%s266] sm:$0xff]
      %v288 = vld [vmem:[%s266 + $0x8] sm:$0xff]
      %v289 = vmul.f32 %v285, %v287
      %v290 = vmul.f32 %v286, %v288
      %v292 = vsel %vm274, %v272, 0
      %v295 = vsel %vm274, %v273, 0
      %297 = vmatprep.subr.mxu0 0.0
      %298 = vmatpush1.msra.mxu0 %v289
      %299 = vmatprep.subr.mxu0 0.0
      %300 = vmatpush1.msra.mxu0 %v290
      %301 = vmatprep.subr.mxu0 0.0
      %302 = vmatpush1.msra.mxu0 0.0
      %303 = vmatprep.subr.mxu0 0.0
      %304 = vmatpush1.msra.mxu0 0.0
      %305 = vmatprep.subr.mxu0 0.0
      %306 = vmatpush1.msra.mxu0 0.0
      %307 = vmatprep.subr.mxu0 0.0
      %308 = vmatpush1.msra.mxu0 0.0
      %309 = vmatprep.subr.mxu0 0.0
      %310 = vmatpush1.msra.mxu0 0.0
      %311 = vmatprep.subr.mxu0 0.0
      %312 = vmatpush1.msra.mxu0 0.0
      %313 = vmatprep.subr.mxu0 0.0
      %314 = vmatpush1.msra.mxu0 0.0
      %315 = vmatprep.subr.mxu0 0.0
      %316 = vmatpush1.msra.mxu0 0.0
      %317 = vmatprep.subr.mxu0 0.0
      %318 = vmatpush1.msra.mxu0 0.0
      %319 = vmatprep.subr.mxu0 0.0
      %320 = vmatpush1.msra.mxu0 0.0
      %321 = vmatprep.subr.mxu0 0.0
      %322 = vmatpush1.msra.mxu0 0.0
      %323 = vmatprep.subr.mxu0 0.0
      %324 = vmatpush1.msra.mxu0 0.0
      %325 = vmatprep.subr.mxu0 0.0
      %326 = vmatpush1.msra.mxu0 0.0
      %327 = vmatprep.subr.mxu0 0.0
      %328 = vmatpush1.msra.mxu0 0.0
      %329 = vmatprep.subr.mxu0 0.0
      %330 = vmatpush1.msra.mxu0 0.0
      %331 = vmatprep.subr.mxu0 0.0
      %332 = vmatpush1.msra.mxu0 0.0
      %333 = vmatprep.subr.mxu0 0.0
      %334 = vmatpush1.msra.mxu0 0.0
      %335 = vmatprep.subr.mxu0 0.0
      %336 = vmatpush1.msra.mxu0 0.0
      %337 = vmatprep.subr.mxu0 0.0
      %338 = vmatpush1.msra.mxu0 0.0
      %339 = vmatprep.subr.mxu0 0.0
      %340 = vmatpush1.msra.mxu0 0.0
      %341 = vmatprep.subr.mxu0 0.0
      %342 = vmatpush1.msra.mxu0 0.0
      %343 = vmatprep.subr.mxu0 0.0
      %344 = vmatpush1.msra.mxu0 0.0
      %345 = vmatprep.subr.mxu0 0.0
      %346 = vmatpush1.msra.mxu0 0.0
      %347 = vmatprep.subr.mxu0 0.0
      %348 = vmatpush1.msra.mxu0 0.0
      %349 = vmatprep.subr.mxu0 0.0
      %350 = vmatpush1.msra.mxu0 0.0
      %351 = vmatprep.subr.mxu0 0.0
      %352 = vmatpush1.msra.mxu0 0.0
      %353 = vmatprep.subr.mxu0 0.0
      %354 = vmatpush1.msra.mxu0 0.0
      %355 = vmatprep.subr.mxu0 0.0
      %356 = vmatpush1.msra.mxu0 0.0
      %357 = vmatprep.subr.mxu0 0.0
      %358 = vmatpush1.msra.mxu0 0.0
      %359 = vmatprep.subr.mxu0 0.0
      %360 = vmatpush1.msra.mxu0 0.0
      %361 = vmatprep.mubr.f32.mxu0 0.0
      %362 = vmatmul.mubr.f32.gmra.mrb[0].mxu0 %v292
      %v363 = vpop.f32.mrb[0].mxu0
      %v364 = vadd.f32 0.0, %v363
      %v365 = vpop.f32.mrb[0].mxu0
      %366 = vmatprep.mubr.f32.mxu0 0.0
      %367 = vmatmul.mubr.f32.gmra.mrb[0].mxu0 %v295
      %v368 = vpop.f32.mrb[0].mxu0
      %v369 = vadd.f32 0.0, %v368
      %v370 = vpop.f32.mrb[0].mxu0
      %371 = vdwg.mxu0
      %v372 = vmul.f32 %v285, %v364
      %v373 = vmul.f32 %v286, %v369
      %v374 = vsub.f32 %v287, %v372
      %v375 = vsub.f32 %v288, %v373
      %v376 = vmul.f32 %v285, %v374
      %v377 = vmul.f32 %v286, %v375
      %378 = vmatprep.subr.mxu0 0.0
      %379 = vmatpush1.msra.mxu0 %v376
      %380 = vmatprep.subr.mxu0 0.0
      %381 = vmatpush1.msra.mxu0 %v377
      %382 = vmatprep.subr.mxu0 0.0
      %383 = vmatpush1.msra.mxu0 0.0
      %384 = vmatprep.subr.mxu0 0.0
      %385 = vmatpush1.msra.mxu0 0.0
      %386 = vmatprep.subr.mxu0 0.0
      %387 = vmatpush1.msra.mxu0 0.0
      %388 = vmatprep.subr.mxu0 0.0
      %389 = vmatpush1.msra.mxu0 0.0
      %390 = vmatprep.subr.mxu0 0.0
      %391 = vmatpush1.msra.mxu0 0.0
      %392 = vmatprep.subr.mxu0 0.0
      %393 = vmatpush1.msra.mxu0 0.0
      %394 = vmatprep.subr.mxu0 0.0
      %395 = vmatpush1.msra.mxu0 0.0
      %396 = vmatprep.subr.mxu0 0.0
      %397 = vmatpush1.msra.mxu0 0.0
      %398 = vmatprep.subr.mxu0 0.0
      %399 = vmatpush1.msra.mxu0 0.0
      %400 = vmatprep.subr.mxu0 0.0
      %401 = vmatpush1.msra.mxu0 0.0
      %402 = vmatprep.subr.mxu0 0.0
      %403 = vmatpush1.msra.mxu0 0.0
      %404 = vmatprep.subr.mxu0 0.0
      %405 = vmatpush1.msra.mxu0 0.0
      %406 = vmatprep.subr.mxu0 0.0
      %407 = vmatpush1.msra.mxu0 0.0
      %408 = vmatprep.subr.mxu0 0.0
      %409 = vmatpush1.msra.mxu0 0.0
      %410 = vmatprep.subr.mxu0 0.0
      %411 = vmatpush1.msra.mxu0 0.0
      %412 = vmatprep.subr.mxu0 0.0
      %413 = vmatpush1.msra.mxu0 0.0
      %414 = vmatprep.subr.mxu0 0.0
      %415 = vmatpush1.msra.mxu0 0.0
      %416 = vmatprep.subr.mxu0 0.0
      %417 = vmatpush1.msra.mxu0 0.0
      %418 = vmatprep.subr.mxu0 0.0
      %419 = vmatpush1.msra.mxu0 0.0
      %420 = vmatprep.subr.mxu0 0.0
      %421 = vmatpush1.msra.mxu0 0.0
      %422 = vmatprep.subr.mxu0 0.0
      %423 = vmatpush1.msra.mxu0 0.0
      %424 = vmatprep.subr.mxu0 0.0
      %425 = vmatpush1.msra.mxu0 0.0
      %426 = vmatprep.subr.mxu0 0.0
      %427 = vmatpush1.msra.mxu0 0.0
      %428 = vmatprep.subr.mxu0 0.0
      %429 = vmatpush1.msra.mxu0 0.0
      %430 = vmatprep.subr.mxu0 0.0
      %431 = vmatpush1.msra.mxu0 0.0
      %432 = vmatprep.subr.mxu0 0.0
      %433 = vmatpush1.msra.mxu0 0.0
      %434 = vmatprep.subr.mxu0 0.0
      %435 = vmatpush1.msra.mxu0 0.0
      %436 = vmatprep.subr.mxu0 0.0
      %437 = vmatpush1.msra.mxu0 0.0
      %438 = vmatprep.subr.mxu0 0.0
      %439 = vmatpush1.msra.mxu0 0.0
      %440 = vmatprep.subr.mxu0 0.0
      %441 = vmatpush1.msra.mxu0 0.0
      %442 = vmatprep.mubr.f32.mxu0 0.0
      %443 = vmatmul.mubr.f32.gmra.mrb[0].mxu0 %v292
      %v444 = vpop.f32.mrb[0].mxu0
      %v445 = vadd.f32 0.0, %v444
      %v446 = vpop.f32.mrb[0].mxu0
      %447 = vmatprep.mubr.f32.mxu0 0.0
      %448 = vmatmul.mubr.f32.gmra.mrb[0].mxu0 %v295
      %v449 = vpop.f32.mrb[0].mxu0
      %v450 = vadd.f32 0.0, %v449
      %v451 = vpop.f32.mrb[0].mxu0
      %452 = vdwg.mxu0
      %v453 = vmul.f32 %v285, %v445
      %v454 = vmul.f32 %v286, %v450
      %v455 = vsub.f32 %v374, %v453
      %v456 = vsub.f32 %v375, %v454
      %v457 = vmul.f32 %v455, 2.0
      %v458 = vmul.f32 %v456, 2.0
      %v459 = vsub.f32 %v457, %v287
      %v460 = vsub.f32 %v458, %v288
      %v461 = vmul.f32 %v285, %v459
      %v462 = vmul.f32 %v286, %v460
      %463 = vmatprep.subr.mxu0 0.0
      %464 = vmatpush1.msra.mxu0 %v461
      %465 = vmatprep.subr.mxu0 0.0
      %466 = vmatpush1.msra.mxu0 %v462
      %467 = vmatprep.subr.mxu0 0.0
      %468 = vmatpush1.msra.mxu0 0.0
      %469 = vmatprep.subr.mxu0 0.0
      %470 = vmatpush1.msra.mxu0 0.0
      %471 = vmatprep.subr.mxu0 0.0
      %472 = vmatpush1.msra.mxu0 0.0
      %473 = vmatprep.subr.mxu0 0.0
      %474 = vmatpush1.msra.mxu0 0.0
      %475 = vmatprep.subr.mxu0 0.0
      %476 = vmatpush1.msra.mxu0 0.0
      %477 = vmatprep.subr.mxu0 0.0
      %478 = vmatpush1.msra.mxu0 0.0
      %479 = vmatprep.subr.mxu0 0.0
      %480 = vmatpush1.msra.mxu0 0.0
      %481 = vmatprep.subr.mxu0 0.0
      %482 = vmatpush1.msra.mxu0 0.0
      %483 = vmatprep.subr.mxu0 0.0
      %484 = vmatpush1.msra.mxu0 0.0
      %485 = vmatprep.subr.mxu0 0.0
      %486 = vmatpush1.msra.mxu0 0.0
      %487 = vmatprep.subr.mxu0 0.0
      %488 = vmatpush1.msra.mxu0 0.0
      %489 = vmatprep.subr.mxu0 0.0
      %490 = vmatpush1.msra.mxu0 0.0
      %491 = vmatprep.subr.mxu0 0.0
      %492 = vmatpush1.msra.mxu0 0.0
      %493 = vmatprep.subr.mxu0 0.0
      %494 = vmatpush1.msra.mxu0 0.0
      %495 = vmatprep.subr.mxu0 0.0
      %496 = vmatpush1.msra.mxu0 0.0
      %497 = vmatprep.subr.mxu0 0.0
      %498 = vmatpush1.msra.mxu0 0.0
      %499 = vmatprep.subr.mxu0 0.0
      %500 = vmatpush1.msra.mxu0 0.0
      %501 = vmatprep.subr.mxu0 0.0
      %502 = vmatpush1.msra.mxu0 0.0
      %503 = vmatprep.subr.mxu0 0.0
      %504 = vmatpush1.msra.mxu0 0.0
      %505 = vmatprep.subr.mxu0 0.0
      %506 = vmatpush1.msra.mxu0 0.0
      %507 = vmatprep.subr.mxu0 0.0
      %508 = vmatpush1.msra.mxu0 0.0
      %509 = vmatprep.subr.mxu0 0.0
      %510 = vmatpush1.msra.mxu0 0.0
      %511 = vmatprep.subr.mxu0 0.0
      %512 = vmatpush1.msra.mxu0 0.0
      %513 = vmatprep.subr.mxu0 0.0
      %514 = vmatpush1.msra.mxu0 0.0
      %515 = vmatprep.subr.mxu0 0.0
      %516 = vmatpush1.msra.mxu0 0.0
      %517 = vmatprep.subr.mxu0 0.0
      %518 = vmatpush1.msra.mxu0 0.0
      %519 = vmatprep.subr.mxu0 0.0
      %520 = vmatpush1.msra.mxu0 0.0
      %521 = vmatprep.subr.mxu0 0.0
      %522 = vmatpush1.msra.mxu0 0.0
      %523 = vmatprep.subr.mxu0 0.0
      %524 = vmatpush1.msra.mxu0 0.0
      %525 = vmatprep.subr.mxu0 0.0
      %526 = vmatpush1.msra.mxu0 0.0
      %527 = vmatprep.mubr.f32.mxu0 0.0
      %528 = vmatmul.mubr.f32.gmra.mrb[0].mxu0 %v292
      %v529 = vpop.f32.mrb[0].mxu0
      %v530 = vadd.f32 0.0, %v529
      %v531 = vpop.f32.mrb[0].mxu0
      %532 = vmatprep.mubr.f32.mxu0 0.0
      %533 = vmatmul.mubr.f32.gmra.mrb[0].mxu0 %v295
      %v534 = vpop.f32.mrb[0].mxu0
      %v535 = vadd.f32 0.0, %v534
      %v536 = vpop.f32.mrb[0].mxu0
      %537 = vdwg.mxu0
      %v538 = vmul.f32 %v285, %v530
      %v539 = vmul.f32 %v286, %v535
      %v540 = vsub.f32 %v459, %v538
      %v541 = vsub.f32 %v460, %v539
      %v542 = vmul.f32 %v540, 2.0
      %v543 = vmul.f32 %v541, 2.0
      %v544 = vsub.f32 %v542, %v374
      %v545 = vsub.f32 %v543, %v375
      %548 = vrot.lane.b32.xlu0 %v374, 4
      %v549 = vpop.permute.xlu0 %548
      %550 = vrot.lane.b32.xlu0 %v375, 4
      %v551 = vpop.permute.xlu0 %550
      %556 = vrot.lane.b32.xlu0 %v459, 8
      %v557 = vpop.permute.xlu0 %556
      %558 = vrot.lane.b32.xlu0 %v460, 8
      %v559 = vpop.permute.xlu0 %558
      %564 = vrot.lane.b32.xlu0 %v544, 12
      %v565 = vpop.permute.xlu0 %564
      %566 = vrot.lane.b32.xlu0 %v545, 12
      %v567 = vpop.permute.xlu0 %566
      %vm570 = vcmask 31744
      %v571 = vsel %vm570, %v287, %v549
      %v572 = vsel %vm570, %v288, %v551
      %vm573 = vcmask 64512
      %v574 = vsel %vm573, %v571, %v557
      %v575 = vsel %vm573, %v572, %v559
      %vm576 = vcmask 97280
      %v577 = vsel %vm576, %v574, %v565
      %v578 = vsel %vm576, %v575, %v567
      %v579 = vld [vmem:[%s2] sm:$0xff]
      %v580 = vld [vmem:[%s2 + $0x8] sm:$0xff]
      %v581 = vld [vmem:[%s3] sm:$0x1]
      %v583 = vlaneseq
      %v584 = vshrl.u32 %v583, 7
      %v585 = vsub.s32 0, %v584
      %v586 = vrot.slane %v581, %v585
      %v589 = vsel %vm274, %v577, 0
      %v592 = vsel %vm274, %v578, 0
      %594 = vmatprep.subr.mxu0 0.0
      %595 = vmatpush1.msra.mxu0 %v579
      %596 = vmatprep.subr.mxu0 0.0
      %597 = vmatpush1.msra.mxu0 %v580
      %598 = vmatprep.subr.mxu0 0.0
      %599 = vmatpush1.msra.mxu0 0.0
      %600 = vmatprep.subr.mxu0 0.0
      %601 = vmatpush1.msra.mxu0 0.0
      %602 = vmatprep.subr.mxu0 0.0
      %603 = vmatpush1.msra.mxu0 0.0
      %604 = vmatprep.subr.mxu0 0.0
      %605 = vmatpush1.msra.mxu0 0.0
      %606 = vmatprep.subr.mxu0 0.0
      %607 = vmatpush1.msra.mxu0 0.0
      %608 = vmatprep.subr.mxu0 0.0
      %609 = vmatpush1.msra.mxu0 0.0
      %610 = vmatprep.subr.mxu0 0.0
      %611 = vmatpush1.msra.mxu0 0.0
      %612 = vmatprep.subr.mxu0 0.0
      %613 = vmatpush1.msra.mxu0 0.0
      %614 = vmatprep.subr.mxu0 0.0
      %615 = vmatpush1.msra.mxu0 0.0
      %616 = vmatprep.subr.mxu0 0.0
      %617 = vmatpush1.msra.mxu0 0.0
      %618 = vmatprep.subr.mxu0 0.0
      %619 = vmatpush1.msra.mxu0 0.0
      %620 = vmatprep.subr.mxu0 0.0
      %621 = vmatpush1.msra.mxu0 0.0
      %622 = vmatprep.subr.mxu0 0.0
      %623 = vmatpush1.msra.mxu0 0.0
      %624 = vmatprep.subr.mxu0 0.0
      %625 = vmatpush1.msra.mxu0 0.0
      %626 = vmatprep.subr.mxu0 0.0
      %627 = vmatpush1.msra.mxu0 0.0
      %628 = vmatprep.subr.mxu0 0.0
      %629 = vmatpush1.msra.mxu0 0.0
      %630 = vmatprep.subr.mxu0 0.0
      %631 = vmatpush1.msra.mxu0 0.0
      %632 = vmatprep.subr.mxu0 0.0
      %633 = vmatpush1.msra.mxu0 0.0
      %634 = vmatprep.subr.mxu0 0.0
      %635 = vmatpush1.msra.mxu0 0.0
      %636 = vmatprep.subr.mxu0 0.0
      %637 = vmatpush1.msra.mxu0 0.0
      %638 = vmatprep.subr.mxu0 0.0
      %639 = vmatpush1.msra.mxu0 0.0
      %640 = vmatprep.subr.mxu0 0.0
      %641 = vmatpush1.msra.mxu0 0.0
      %642 = vmatprep.subr.mxu0 0.0
      %643 = vmatpush1.msra.mxu0 0.0
      %644 = vmatprep.subr.mxu0 0.0
      %645 = vmatpush1.msra.mxu0 0.0
      %646 = vmatprep.subr.mxu0 0.0
      %647 = vmatpush1.msra.mxu0 0.0
      %648 = vmatprep.subr.mxu0 0.0
      %649 = vmatpush1.msra.mxu0 0.0
      %650 = vmatprep.subr.mxu0 0.0
      %651 = vmatpush1.msra.mxu0 0.0
      %652 = vmatprep.subr.mxu0 0.0
      %653 = vmatpush1.msra.mxu0 0.0
      %654 = vmatprep.subr.mxu0 0.0
      %655 = vmatpush1.msra.mxu0 0.0
      %656 = vmatprep.subr.mxu0 0.0
      %657 = vmatpush1.msra.mxu0 0.0
      %658 = vmatprep.mubr.f32.mxu0 0.0
      %659 = vmatmul.mubr.f32.gmra.mrb[0].mxu0 %v589
      %v660 = vpop.f32.mrb[0].mxu0
      %v661 = vadd.f32 %v586, %v660
      %v662 = vpop.f32.mrb[0].mxu0
      %663 = vmatprep.mubr.f32.mxu0 0.0
      %664 = vmatmul.mubr.f32.gmra.mrb[0].mxu0 %v592
      %v665 = vpop.f32.mrb[0].mxu0
      %v666 = vadd.f32 %v586, %v665
      %v667 = vpop.f32.mrb[0].mxu0
      %668 = vdwg.mxu0
      %v669 = vmax.f32 %v661, 0.0
      %v670 = vmax.f32 %v666, 0.0
      %v671 = vmul.f32 %v285, %v669
      %v672 = vmul.f32 %v286, %v670
      %673 = vmatprep.subr.mxu0 0.0
      %674 = vmatpush1.msra.mxu0 %v671
      %675 = vmatprep.subr.mxu0 0.0
      %676 = vmatpush1.msra.mxu0 %v672
      %677 = vmatprep.subr.mxu0 0.0
      %678 = vmatpush1.msra.mxu0 0.0
      %679 = vmatprep.subr.mxu0 0.0
      %680 = vmatpush1.msra.mxu0 0.0
      %681 = vmatprep.subr.mxu0 0.0
      %682 = vmatpush1.msra.mxu0 0.0
      %683 = vmatprep.subr.mxu0 0.0
      %684 = vmatpush1.msra.mxu0 0.0
      %685 = vmatprep.subr.mxu0 0.0
      %686 = vmatpush1.msra.mxu0 0.0
      %687 = vmatprep.subr.mxu0 0.0
      %688 = vmatpush1.msra.mxu0 0.0
      %689 = vmatprep.subr.mxu0 0.0
      %690 = vmatpush1.msra.mxu0 0.0
      %691 = vmatprep.subr.mxu0 0.0
      %692 = vmatpush1.msra.mxu0 0.0
      %693 = vmatprep.subr.mxu0 0.0
      %694 = vmatpush1.msra.mxu0 0.0
      %695 = vmatprep.subr.mxu0 0.0
      %696 = vmatpush1.msra.mxu0 0.0
      %697 = vmatprep.subr.mxu0 0.0
      %698 = vmatpush1.msra.mxu0 0.0
      %699 = vmatprep.subr.mxu0 0.0
      %700 = vmatpush1.msra.mxu0 0.0
      %701 = vmatprep.subr.mxu0 0.0
      %702 = vmatpush1.msra.mxu0 0.0
      %703 = vmatprep.subr.mxu0 0.0
      %704 = vmatpush1.msra.mxu0 0.0
      %705 = vmatprep.subr.mxu0 0.0
      %706 = vmatpush1.msra.mxu0 0.0
      %707 = vmatprep.subr.mxu0 0.0
      %708 = vmatpush1.msra.mxu0 0.0
      %709 = vmatprep.subr.mxu0 0.0
      %710 = vmatpush1.msra.mxu0 0.0
      %711 = vmatprep.subr.mxu0 0.0
      %712 = vmatpush1.msra.mxu0 0.0
      %713 = vmatprep.subr.mxu0 0.0
      %714 = vmatpush1.msra.mxu0 0.0
      %715 = vmatprep.subr.mxu0 0.0
      %716 = vmatpush1.msra.mxu0 0.0
      %717 = vmatprep.subr.mxu0 0.0
      %718 = vmatpush1.msra.mxu0 0.0
      %719 = vmatprep.subr.mxu0 0.0
      %720 = vmatpush1.msra.mxu0 0.0
      %721 = vmatprep.subr.mxu0 0.0
      %722 = vmatpush1.msra.mxu0 0.0
      %723 = vmatprep.subr.mxu0 0.0
      %724 = vmatpush1.msra.mxu0 0.0
      %725 = vmatprep.subr.mxu0 0.0
      %726 = vmatpush1.msra.mxu0 0.0
      %727 = vmatprep.subr.mxu0 0.0
      %728 = vmatpush1.msra.mxu0 0.0
      %729 = vmatprep.subr.mxu0 0.0
      %730 = vmatpush1.msra.mxu0 0.0
      %731 = vmatprep.subr.mxu0 0.0
      %732 = vmatpush1.msra.mxu0 0.0
      %733 = vmatprep.subr.mxu0 0.0
      %734 = vmatpush1.msra.mxu0 0.0
      %735 = vmatprep.subr.mxu0 0.0
      %736 = vmatpush1.msra.mxu0 0.0
      %737 = vmatprep.mubr.f32.mxu0 0.0
      %738 = vmatmul.mubr.f32.gmra.mrb[0].mxu0 %v292
      %v739 = vpop.f32.mrb[0].mxu0
      %v740 = vadd.f32 0.0, %v739
      %v741 = vpop.f32.mrb[0].mxu0
      %742 = vmatprep.mubr.f32.mxu0 0.0
      %743 = vmatmul.mubr.f32.gmra.mrb[0].mxu0 %v295
      %v744 = vpop.f32.mrb[0].mxu0
      %v745 = vadd.f32 0.0, %v744
      %v746 = vpop.f32.mrb[0].mxu0
      %747 = vdwg.mxu0
      %v748 = vmul.f32 %v285, %v740
      %v749 = vmul.f32 %v286, %v745
      %v750 = vsub.f32 %v669, %v748
      %v751 = vsub.f32 %v670, %v749
      %v752 = vmul.f32 %v285, %v750
      %v753 = vmul.f32 %v286, %v751
      %754 = vmatprep.subr.mxu0 0.0
      %755 = vmatpush1.msra.mxu0 %v752
      %756 = vmatprep.subr.mxu0 0.0
      %757 = vmatpush1.msra.mxu0 %v753
      %758 = vmatprep.subr.mxu0 0.0
      %759 = vmatpush1.msra.mxu0 0.0
      %760 = vmatprep.subr.mxu0 0.0
      %761 = vmatpush1.msra.mxu0 0.0
      %762 = vmatprep.subr.mxu0 0.0
      %763 = vmatpush1.msra.mxu0 0.0
      %764 = vmatprep.subr.mxu0 0.0
      %765 = vmatpush1.msra.mxu0 0.0
      %766 = vmatprep.subr.mxu0 0.0
      %767 = vmatpush1.msra.mxu0 0.0
      %768 = vmatprep.subr.mxu0 0.0
      %769 = vmatpush1.msra.mxu0 0.0
      %770 = vmatprep.subr.mxu0 0.0
      %771 = vmatpush1.msra.mxu0 0.0
      %772 = vmatprep.subr.mxu0 0.0
      %773 = vmatpush1.msra.mxu0 0.0
      %774 = vmatprep.subr.mxu0 0.0
      %775 = vmatpush1.msra.mxu0 0.0
      %776 = vmatprep.subr.mxu0 0.0
      %777 = vmatpush1.msra.mxu0 0.0
      %778 = vmatprep.subr.mxu0 0.0
      %779 = vmatpush1.msra.mxu0 0.0
      %780 = vmatprep.subr.mxu0 0.0
      %781 = vmatpush1.msra.mxu0 0.0
      %782 = vmatprep.subr.mxu0 0.0
      %783 = vmatpush1.msra.mxu0 0.0
      %784 = vmatprep.subr.mxu0 0.0
      %785 = vmatpush1.msra.mxu0 0.0
      %786 = vmatprep.subr.mxu0 0.0
      %787 = vmatpush1.msra.mxu0 0.0
      %788 = vmatprep.subr.mxu0 0.0
      %789 = vmatpush1.msra.mxu0 0.0
      %790 = vmatprep.subr.mxu0 0.0
      %791 = vmatpush1.msra.mxu0 0.0
      %792 = vmatprep.subr.mxu0 0.0
      %793 = vmatpush1.msra.mxu0 0.0
      %794 = vmatprep.subr.mxu0 0.0
      %795 = vmatpush1.msra.mxu0 0.0
      %796 = vmatprep.subr.mxu0 0.0
      %797 = vmatpush1.msra.mxu0 0.0
      %798 = vmatprep.subr.mxu0 0.0
      %799 = vmatpush1.msra.mxu0 0.0
      %800 = vmatprep.subr.mxu0 0.0
      %801 = vmatpush1.msra.mxu0 0.0
      %802 = vmatprep.subr.mxu0 0.0
      %803 = vmatpush1.msra.mxu0 0.0
      %804 = vmatprep.subr.mxu0 0.0
      %805 = vmatpush1.msra.mxu0 0.0
      %806 = vmatprep.subr.mxu0 0.0
      %807 = vmatpush1.msra.mxu0 0.0
      %808 = vmatprep.subr.mxu0 0.0
      %809 = vmatpush1.msra.mxu0 0.0
      %810 = vmatprep.subr.mxu0 0.0
      %811 = vmatpush1.msra.mxu0 0.0
      %812 = vmatprep.subr.mxu0 0.0
      %813 = vmatpush1.msra.mxu0 0.0
      %814 = vmatprep.subr.mxu0 0.0
      %815 = vmatpush1.msra.mxu0 0.0
      %816 = vmatprep.subr.mxu0 0.0
      %817 = vmatpush1.msra.mxu0 0.0
      %818 = vmatprep.mubr.f32.mxu0 0.0
      %819 = vmatmul.mubr.f32.gmra.mrb[0].mxu0 %v292
      %v820 = vpop.f32.mrb[0].mxu0
      %v821 = vadd.f32 0.0, %v820
      %v822 = vpop.f32.mrb[0].mxu0
      %823 = vmatprep.mubr.f32.mxu0 0.0
      %824 = vmatmul.mubr.f32.gmra.mrb[0].mxu0 %v295
      %v825 = vpop.f32.mrb[0].mxu0
      %v826 = vadd.f32 0.0, %v825
      %v827 = vpop.f32.mrb[0].mxu0
      %828 = vdwg.mxu0
      %v829 = vmul.f32 %v285, %v821
      %v830 = vmul.f32 %v286, %v826
      %v831 = vsub.f32 %v750, %v829
      %v832 = vsub.f32 %v751, %v830
      %v833 = vmul.f32 %v831, 2.0
      %v834 = vmul.f32 %v832, 2.0
      %v835 = vsub.f32 %v833, %v669
      %v836 = vsub.f32 %v834, %v670
      %v837 = vmul.f32 %v285, %v835
      %v838 = vmul.f32 %v286, %v836
      %839 = vmatprep.subr.mxu0 0.0
      %840 = vmatpush1.msra.mxu0 %v837
      %841 = vmatprep.subr.mxu0 0.0
      %842 = vmatpush1.msra.mxu0 %v838
      %843 = vmatprep.subr.mxu0 0.0
      %844 = vmatpush1.msra.mxu0 0.0
      %845 = vmatprep.subr.mxu0 0.0
      %846 = vmatpush1.msra.mxu0 0.0
      %847 = vmatprep.subr.mxu0 0.0
      %848 = vmatpush1.msra.mxu0 0.0
      %849 = vmatprep.subr.mxu0 0.0
      %850 = vmatpush1.msra.mxu0 0.0
      %851 = vmatprep.subr.mxu0 0.0
      %852 = vmatpush1.msra.mxu0 0.0
      %853 = vmatprep.subr.mxu0 0.0
      %854 = vmatpush1.msra.mxu0 0.0
      %855 = vmatprep.subr.mxu0 0.0
      %856 = vmatpush1.msra.mxu0 0.0
      %857 = vmatprep.subr.mxu0 0.0
      %858 = vmatpush1.msra.mxu0 0.0
      %859 = vmatprep.subr.mxu0 0.0
      %860 = vmatpush1.msra.mxu0 0.0
      %861 = vmatprep.subr.mxu0 0.0
      %862 = vmatpush1.msra.mxu0 0.0
      %863 = vmatprep.subr.mxu0 0.0
      %864 = vmatpush1.msra.mxu0 0.0
      %865 = vmatprep.subr.mxu0 0.0
      %866 = vmatpush1.msra.mxu0 0.0
      %867 = vmatprep.subr.mxu0 0.0
      %868 = vmatpush1.msra.mxu0 0.0
      %869 = vmatprep.subr.mxu0 0.0
      %870 = vmatpush1.msra.mxu0 0.0
      %871 = vmatprep.subr.mxu0 0.0
      %872 = vmatpush1.msra.mxu0 0.0
      %873 = vmatprep.subr.mxu0 0.0
      %874 = vmatpush1.msra.mxu0 0.0
      %875 = vmatprep.subr.mxu0 0.0
      %876 = vmatpush1.msra.mxu0 0.0
      %877 = vmatprep.subr.mxu0 0.0
      %878 = vmatpush1.msra.mxu0 0.0
      %879 = vmatprep.subr.mxu0 0.0
      %880 = vmatpush1.msra.mxu0 0.0
      %881 = vmatprep.subr.mxu0 0.0
      %882 = vmatpush1.msra.mxu0 0.0
      %883 = vmatprep.subr.mxu0 0.0
      %884 = vmatpush1.msra.mxu0 0.0
      %885 = vmatprep.subr.mxu0 0.0
      %886 = vmatpush1.msra.mxu0 0.0
      %887 = vmatprep.subr.mxu0 0.0
      %888 = vmatpush1.msra.mxu0 0.0
      %889 = vmatprep.subr.mxu0 0.0
      %890 = vmatpush1.msra.mxu0 0.0
      %891 = vmatprep.subr.mxu0 0.0
      %892 = vmatpush1.msra.mxu0 0.0
      %893 = vmatprep.subr.mxu0 0.0
      %894 = vmatpush1.msra.mxu0 0.0
      %895 = vmatprep.subr.mxu0 0.0
      %896 = vmatpush1.msra.mxu0 0.0
      %897 = vmatprep.subr.mxu0 0.0
      %898 = vmatpush1.msra.mxu0 0.0
      %899 = vmatprep.subr.mxu0 0.0
      %900 = vmatpush1.msra.mxu0 0.0
      %901 = vmatprep.subr.mxu0 0.0
      %902 = vmatpush1.msra.mxu0 0.0
      %903 = vmatprep.mubr.f32.mxu0 0.0
      %904 = vmatmul.mubr.f32.gmra.mrb[0].mxu0 %v292
      %v905 = vpop.f32.mrb[0].mxu0
      %v906 = vadd.f32 0.0, %v905
      %v907 = vpop.f32.mrb[0].mxu0
      %908 = vmatprep.mubr.f32.mxu0 0.0
      %909 = vmatmul.mubr.f32.gmra.mrb[0].mxu0 %v295
      %v910 = vpop.f32.mrb[0].mxu0
      %v911 = vadd.f32 0.0, %v910
      %v912 = vpop.f32.mrb[0].mxu0
      %913 = vdwg.mxu0
      %v914 = vmul.f32 %v285, %v906
      %v915 = vmul.f32 %v286, %v911
      %v916 = vsub.f32 %v835, %v914
      %v917 = vsub.f32 %v836, %v915
      %v918 = vmul.f32 %v916, 2.0
      %v919 = vmul.f32 %v917, 2.0
      %v920 = vsub.f32 %v918, %v750
      %v921 = vsub.f32 %v919, %v751
      %924 = vrot.lane.b32.xlu0 %v750, 32
      %v925 = vpop.permute.xlu0 %924
      %926 = vrot.lane.b32.xlu0 %v751, 32
      %v927 = vpop.permute.xlu0 %926
      %932 = vrot.lane.b32.xlu0 %v835, 64
      %v933 = vpop.permute.xlu0 %932
      %934 = vrot.lane.b32.xlu0 %v836, 64
      %v935 = vpop.permute.xlu0 %934
      %940 = vrot.lane.b32.xlu0 %v920, 96
      %v941 = vpop.permute.xlu0 %940
      %942 = vrot.lane.b32.xlu0 %v921, 96
      %v943 = vpop.permute.xlu0 %942
      %vm946 = vcmask 261120
      %v947 = vsel %vm946, %v669, %v925
      %v948 = vsel %vm946, %v670, %v927
      %vm949 = vcmask 523264
      %v950 = vsel %vm949, %v947, %v933
      %v951 = vsel %vm949, %v948, %v935
      %vm952 = vcmask 785408
      %v953 = vsel %vm952, %v950, %v941
      %v954 = vsel %vm952, %v951, %v943
      %v955 = vld [vmem:[%s4] sm:$0xff]
      %v956 = vld [vmem:[%s4 + $0x8] sm:$0xff]
      %v957 = vld [vmem:[%s4 + $0x10] sm:$0xff]
      %v958 = vld [vmem:[%s4 + $0x18] sm:$0xff]
      %v959 = vld [vmem:[%s4 + $0x20] sm:$0xff]
      %v960 = vld [vmem:[%s4 + $0x28] sm:$0xff]
      %v961 = vld [vmem:[%s4 + $0x30] sm:$0xff]
      %v962 = vld [vmem:[%s4 + $0x38] sm:$0xff]
      %v963 = vld [vmem:[%s4 + $0x40] sm:$0xff]
      %v964 = vld [vmem:[%s4 + $0x48] sm:$0xff]
      %v965 = vld [vmem:[%s4 + $0x50] sm:$0xff]
      %v966 = vld [vmem:[%s4 + $0x58] sm:$0xff]
      %v967 = vld [vmem:[%s4 + $0x60] sm:$0xff]
      %v968 = vld [vmem:[%s4 + $0x68] sm:$0xff]
      %v969 = vld [vmem:[%s4 + $0x70] sm:$0xff]
      %v970 = vld [vmem:[%s4 + $0x78] sm:$0xff]
      %v971 = vld [vmem:[%s5] sm:$0x1]
      %v973 = vlaneseq
      %v974 = vshrl.u32 %v973, 7
      %v975 = vsub.s32 0, %v974
      %v976 = vrot.slane %v971, %v975
      %978 = vmatprep.subr.mxu0 0.0
      %979 = vmatpush1.msra.mxu0 %v955
      %980 = vmatprep.subr.mxu0 0.0
      %981 = vmatpush1.msra.mxu0 %v956
      %982 = vmatprep.subr.mxu0 0.0
      %983 = vmatpush1.msra.mxu0 %v957
      %984 = vmatprep.subr.mxu0 0.0
      %985 = vmatpush1.msra.mxu0 %v958
      %986 = vmatprep.subr.mxu0 0.0
      %987 = vmatpush1.msra.mxu0 %v959
      %988 = vmatprep.subr.mxu0 0.0
      %989 = vmatpush1.msra.mxu0 %v960
      %990 = vmatprep.subr.mxu0 0.0
      %991 = vmatpush1.msra.mxu0 %v961
      %992 = vmatprep.subr.mxu0 0.0
      %993 = vmatpush1.msra.mxu0 %v962
      %994 = vmatprep.subr.mxu0 0.0
      %995 = vmatpush1.msra.mxu0 %v963
      %996 = vmatprep.subr.mxu0 0.0
      %997 = vmatpush1.msra.mxu0 %v964
      %998 = vmatprep.subr.mxu0 0.0
      %999 = vmatpush1.msra.mxu0 %v965
      %1000 = vmatprep.subr.mxu0 0.0
      %1001 = vmatpush1.msra.mxu0 %v966
      %1002 = vmatprep.subr.mxu0 0.0
      %1003 = vmatpush1.msra.mxu0 %v967
      %1004 = vmatprep.subr.mxu0 0.0
      %1005 = vmatpush1.msra.mxu0 %v968
      %1006 = vmatprep.subr.mxu0 0.0
      %1007 = vmatpush1.msra.mxu0 %v969
      %1008 = vmatprep.subr.mxu0 0.0
      %1009 = vmatpush1.msra.mxu0 %v970
      %1010 = vmatprep.subr.mxu0 0.0
      %1011 = vmatpush1.msra.mxu0 0.0
      %1012 = vmatprep.subr.mxu0 0.0
      %1013 = vmatpush1.msra.mxu0 0.0
      %1014 = vmatprep.subr.mxu0 0.0
      %1015 = vmatpush1.msra.mxu0 0.0
      %1016 = vmatprep.subr.mxu0 0.0
      %1017 = vmatpush1.msra.mxu0 0.0
      %1018 = vmatprep.subr.mxu0 0.0
      %1019 = vmatpush1.msra.mxu0 0.0
      %1020 = vmatprep.subr.mxu0 0.0
      %1021 = vmatpush1.msra.mxu0 0.0
      %1022 = vmatprep.subr.mxu0 0.0
      %1023 = vmatpush1.msra.mxu0 0.0
      %1024 = vmatprep.subr.mxu0 0.0
      %1025 = vmatpush1.msra.mxu0 0.0
      %1026 = vmatprep.subr.mxu0 0.0
      %1027 = vmatpush1.msra.mxu0 0.0
      %1028 = vmatprep.subr.mxu0 0.0
      %1029 = vmatpush1.msra.mxu0 0.0
      %1030 = vmatprep.subr.mxu0 0.0
      %1031 = vmatpush1.msra.mxu0 0.0
      %1032 = vmatprep.subr.mxu0 0.0
      %1033 = vmatpush1.msra.mxu0 0.0
      %1034 = vmatprep.subr.mxu0 0.0
      %1035 = vmatpush1.msra.mxu0 0.0
      %1036 = vmatprep.subr.mxu0 0.0
      %1037 = vmatpush1.msra.mxu0 0.0
      %1038 = vmatprep.subr.mxu0 0.0
      %1039 = vmatpush1.msra.mxu0 0.0
      %1040 = vmatprep.subr.mxu0 0.0
      %1041 = vmatpush1.msra.mxu0 0.0
      %1042 = vmatprep.mubr.f32.mxu0 0.0
      %1043 = vmatmul.mubr.f32.gmra.mrb[0].mxu0 %v953
      %v1044 = vpop.f32.mrb[0].mxu0
      %v1045 = vadd.f32 %v976, %v1044
      %v1046 = vpop.f32.mrb[0].mxu0
      %1047 = vmatprep.mubr.f32.mxu0 0.0
      %1048 = vmatmul.mubr.f32.gmra.mrb[0].mxu0 %v954
      %v1049 = vpop.f32.mrb[0].mxu0
      %v1050 = vadd.f32 %v976, %v1049
      %v1051 = vpop.f32.mrb[0].mxu0
      %1052 = vdwg.mxu0
      %v1053 = vmax.f32 %v1045, 0.0
      %v1054 = vmax.f32 %v1050, 0.0
      %1055 = vst.msk [vmem:[%s271] sm:$0xff] %vm573, %v1053
      %1056 = vst.msk [vmem:[%s271 + $0x8] sm:$0xff] %vm573, %v1054
      %p1057 = scmp.lt.s32.totalorder %s17, 1
      %s1058 = scalar_select %p1057, %s17, 1
      %s1059 = smul.addr %s1058, 2
      %s1060 = smul.addr %s1059, 8
      %s1061 = scalar_lea.vmem %s6, %s1060
      // Predicated region
      $region45: #{tpu_custom_call.1} parent=43 // pred_check
        %p1062 = pneg %p171
      $region46: #{tpu_custom_call.1} parent=43 // pred_check_branch
        %1064 = sbr.rel (%p1062) target = $region48
      $region47: #{tpu_custom_call.1} parent=43 // pred_region
        _
      $region48: #{tpu_custom_call.1} parent=43 // pred_fallthru
        _
    $region44: #{tpu_custom_call.1} parent=5 // pred_fallthru
      _
    %p1065 = scmp.le.s32.totalorder 2, %s12
    // Predicated region
    $region49: #{tpu_custom_call.1} parent=5 // pred_check
      %p1066 = pneg %p1065
    $region50: #{tpu_custom_call.1} parent=5 // pred_check_branch
      %1068 = sbr.rel (%p1066) target = $region52
    $region51: #{tpu_custom_call.1} parent=5 // pred_region
      %s1069 = ssub.s32 %s12, 2
      // Predicated region
      $region53: #{tpu_custom_call.1} parent=51 // pred_check
        %p1070 = pneg %p177
      $region54: #{tpu_custom_call.1} parent=51 // pred_check_branch
        %1072 = sbr.rel (%p1070) target = $region56
      $region55: #{tpu_custom_call.1} parent=51 // pred_region
        %p1073 = scmp.lt.s32.totalorder %s18, 1
        %s1074 = scalar_select %p1073, %s18, 1
        %s1075 = smul.addr %s1074, 2
        %s1076 = smul.addr %s1075, 8
        %s1077 = scalar_lea.vmem %s6, %s1076
      $region56: #{tpu_custom_call.1} parent=51 // pred_fallthru
        _
    $region52: #{tpu_custom_call.1} parent=5 // pred_fallthru
      _
  $region6: #{tpu_custom_call.1} parent=0 // loop_footer
    %s16 = sadd.s32 1, %s12
  $region7: #{tpu_custom_call.1} parent=0 // loop_footer_branch
    %11 = sbr.rel target = $region3
  $region8: #{tpu_custom_call.1} parent=0 // loop_exit
    _

</llo_original>
